<compile_context>
chip_gen: v7x
topology: tpu7x:2x2x1
jax: 0.10.0
libtpu: 0.0.40
codegen_flags: <defaults>
</compile_context>

<pallas_src>
import functools

import jax
import jax.numpy as jnp
from jax.experimental import pallas as pl
from jax.experimental.pallas import tpu as pltpu


# ---------------------------------------------------------------------------
# elementwise focal-loss math
# ---------------------------------------------------------------------------
def _stable_pt_terms(s):
    """Given s (f32), return (1 - sigmoid(s), -log(sigmoid(s))) stably.

    Uses exp(-|s|) so exp never overflows, an exact divide (no approx vrcp),
    and the softplus identity -log(sigmoid(s)) = max(-s, 0) + log(1 + e)."""
    em = jnp.exp(-jnp.abs(s))                      # in (0, 1]
    inv = 1.0 / (1.0 + em)                         # exact reciprocal
    one_minus_pt = jnp.where(s >= 0, em * inv, inv)
    neg_log_pt = jnp.maximum(-s, 0.0) + jnp.log(1.0 + em)
    return one_minus_pt, neg_log_pt


def _pow_gamma(v, gamma):
    gf = float(gamma)
    if gf == 0.0:
        return jnp.ones_like(v)
    if gf.is_integer() and 1.0 <= gf <= 8.0:       # integer gamma: VPU multiplies
        r = v
        for _ in range(int(gf) - 1):
            r = r * v
        return r
    return jnp.exp(jnp.float32(gf) * jnp.log(jnp.maximum(v, jnp.float32(1e-30))))


def _focal_block(x_blk, lb_blk, *, alpha, gamma, ignore_lb,
                 in_bounds=None, per_channel=False):
    """x_blk: (C, T) logits (any float dtype); lb_blk: (1, T) int labels.

    Returns (loss, valid_f32) where loss is (C, T) if per_channel else the
    channel-summed (1, T) row. Invalid / out-of-bounds pixels contribute 0
    via selects (never multiplies), so garbage pad values cannot poison the
    result with NaN/Inf."""
    x = x_blk.astype(jnp.float32)                  # (C, T)
    lb = lb_blk.astype(jnp.int32)                  # (1, T)
    c = x.shape[0]

    valid = lb != ignore_lb                        # (1, T) bool
    if in_bounds is not None:
        valid = jnp.logical_and(valid, in_bounds)

    ch = jax.lax.broadcasted_iota(jnp.int32, (c, 1), 0)   # (C, 1)
    onehot = ch == lb                                      # (C, T) via broadcast

    if float(alpha) == 1.0:
        # Fast path: non-target channels have zero weight -> gather the target
        # logit and run the transcendental chain on a single (1, T) row.
        x_t = jnp.sum(jnp.where(onehot, x, 0.0), axis=0, keepdims=True)  # (1, T)
        omp, nlp = _stable_pt_terms(x_t)
        row = _pow_gamma(omp, gamma) * nlp
        row = jnp.where(valid, row, 0.0)
        loss = jnp.where(onehot, row, 0.0) if per_channel else row
    else:
        s = jnp.where(onehot, x, -x)
        omp, nlp = _stable_pt_terms(s)
        alpha_t = jnp.where(onehot, jnp.float32(alpha), jnp.float32(1.0 - alpha))
        full = alpha_t * _pow_gamma(omp, gamma) * nlp       # (C, T)
        full = jnp.where(valid, full, 0.0)
        loss = full if per_channel else jnp.sum(full, axis=0, keepdims=True)

    return loss, valid.astype(jnp.float32)


# ---------------------------------------------------------------------------
# kernels
# ---------------------------------------------------------------------------
def _focal_reduce_kernel(logits_ref, label_ref, *rest,
                         alpha, gamma, ignore_lb, hw, tile_hw,
                         tiles_per_group, need_valid):
    if need_valid:
        loss_out, valid_out, acc_loss, acc_valid = rest
    else:
        loss_out, acc_loss = rest
        valid_out = acc_valid = None

    g = pl.program_id(1)
    t = pl.program_id(2)

    @pl.when(t == 0)
    def _init():
        acc_loss[...] = jnp.zeros_like(acc_loss)
        if need_valid:
            acc_valid[...] = jnp.zeros_like(acc_valid)

    # Global pixel index of every lane in this *logical* block; pixels past HW
    # (tail tile, or a fully out-of-range group block whose read was clamped)
    # are masked out, so no host-side padding of the logits is needed.
    blk = g * tiles_per_group + t
    pix = blk * tile_hw + jax.lax.broadcasted_iota(jnp.int32, (1, tile_hw), 1)
    in_bounds = pix < hw

    loss_row, valid_f = _focal_block(
        logits_ref[0], label_ref[0], alpha=alpha, gamma=gamma,
        ignore_lb=ignore_lb, in_bounds=in_bounds, per_channel=False)

    # elementwise accumulation only (VPU); the single cross-lane reduce and
    # store happen once per (image, group) in the finalize step below.
    acc_loss[...] += loss_row
    if need_valid:
        acc_valid[...] += valid_f

    @pl.when(t == pl.num_programs(2) - 1)
    def _finalize():
        loss_out[0, 0] = (jnp.zeros((8, 128), jnp.float32)
                          + jnp.sum(acc_loss[...]))
        if need_valid:
            valid_out[0, 0] = (jnp.zeros((8, 128), jnp.float32)
                               + jnp.sum(acc_valid[...]))


def _focal_none_kernel(logits_ref, label_ref, out_ref,
                       *, alpha, gamma, ignore_lb):
    loss, _ = _focal_block(
        logits_ref[0], label_ref[0], alpha=alpha, gamma=gamma,
        ignore_lb=ignore_lb, in_bounds=None, per_channel=True)
    out_ref[0] = loss.astype(out_ref.dtype)


# ---------------------------------------------------------------------------
# wrapper
# ---------------------------------------------------------------------------
def _vmem_capacity_bytes():
    try:
        return int(pltpu.get_tpu_info().vmem_capacity_bytes)
    except Exception:
        return 128 * 1024 * 1024


def _choose_tiling(hw, c, logit_itemsize, label_itemsize):
    """Pick a lane-aligned HW tile + a scoped-VMEM budget (generation aware)."""
    lane = 128
    cap = _vmem_capacity_bytes()
    budget = min(cap // 2, 64 * 1024 * 1024)       # 64 MiB on 128 MiB parts, 32 on v7x

    # ~4 MiB logits block per grid step (>= ~1 us DMA even at v7x bandwidth).
    target_block_bytes = 4 * 1024 * 1024
    tile = max(lane, target_block_bytes // max(1, c * logit_itemsize))
    tile = max(lane, (tile // lane) * lane)

    def vmem_needed(t):
        per_step = t * (c * logit_itemsize + label_itemsize)
        return 2 * per_step + 2 * t * 4 + (2 << 20)   # dbl-buffered blocks + accs + slack

    while tile > lane and vmem_needed(tile) > budget:
        tile = max(lane, (tile // 2 // lane) * lane)

    hw_rounded = -(-hw // lane) * lane
    tile = min(tile, hw_rounded)
    if tile >= hw:
        tile = hw                                   # single whole-image block
    return tile, budget


def focal_loss(logits, label, *, alpha=1.0, gamma=2, reduction="sum",
               ignore_lb=255, tile_hw=None, num_groups=None):
    """logits: (N, C, H, W); label: (N, H, W) int.

    reduction='sum'|'mean' -> scalar; anything else -> per-element (N,C,H,W)
    loss (matching the PyTorch module's fall-through behavior)."""
    N, C, H, W = logits.shape
    HW = H * W

    # free reshapes (no NCHW->NHWC transpose): pixels on the lane axis
    x = logits.reshape(N, C, HW)
    if not jnp.issubdtype(label.dtype, jnp.integer):
        label = label.astype(jnp.int32)
    lb = label.reshape(N, 1, HW)                   # 8/16-bit labels pass through

    logit_isz = jnp.dtype(logits.dtype).itemsize
    label_isz = jnp.dtype(lb.dtype).itemsize
    auto_tile, vmem_budget = _choose_tiling(HW, C, logit_isz, label_isz)
    if tile_hw is None:
        tile_hw = auto_tile
    else:
        tile_hw = int(tile_hw)
        if tile_hw >= HW:
            tile_hw = HW
        else:
            tile_hw = max(128, (tile_hw // 128) * 128)

    num_hw_blocks = -(-HW // tile_hw)

    if reduction in ("sum", "mean"):
        need_valid = reduction == "mean"

        # Extra "parallel" axis over groups of HW tiles so both v7x TensorCores
        # have work when N == 1 (no effect on single-TC v5e/v6e).
        if num_groups is None:
            num_groups = 2 if (N == 1 and num_hw_blocks >= 2) else 1
        num_groups = max(1, min(int(num_groups), num_hw_blocks))
        tiles_per_group = -(-num_hw_blocks // num_groups)

        nblk = num_hw_blocks
        tpg = tiles_per_group

        def in_map(n, g, t):
            # clamp so reads stay in bounds; out-of-range logical blocks are
            # masked to zero in-kernel via the global pixel index.
            return (n, 0, jnp.minimum(g * tpg + t, nblk - 1))

        out_map = lambda n, g, t: (n, g, 0, 0)
        part_shape = jax.ShapeDtypeStruct((N, num_groups, 8, 128), jnp.float32)
        part_spec = pl.BlockSpec((1, 1, 8, 128), out_map)

        if need_valid:
            out_shape = (part_shape, part_shape)
            out_specs = (part_spec, part_spec)
            scratch = [pltpu.VMEM((1, tile_hw), jnp.float32),
                       pltpu.VMEM((1, tile_hw), jnp.float32)]
        else:
            out_shape = part_shape
            out_specs = part_spec
            scratch = [pltpu.VMEM((1, tile_hw), jnp.float32)]

        kernel = functools.partial(
            _focal_reduce_kernel, alpha=float(alpha), gamma=gamma,
            ignore_lb=int(ignore_lb), hw=HW, tile_hw=tile_hw,
            tiles_per_group=tiles_per_group, need_valid=need_valid)

        result = pl.pallas_call(
            kernel,
            out_shape=out_shape,
            grid_spec=pltpu.PrefetchScalarGridSpec(
                num_scalar_prefetch=0,
                grid=(N, num_groups, tiles_per_group),
                in_specs=[
                    pl.BlockSpec((1, C, tile_hw), in_map),
                    pl.BlockSpec((1, 1, tile_hw), in_map),
                ],
                out_specs=out_specs,
                scratch_shapes=scratch,
            ),
            compiler_params=pltpu.CompilerParams(
                dimension_semantics=("parallel", "parallel", "arbitrary"),
                vmem_limit_bytes=vmem_budget,
            ),
        )(x, lb)

        if need_valid:
            loss_parts, valid_parts = result
            return (jnp.sum(loss_parts[:, :, 0, 0])
                    / jnp.sum(valid_parts[:, :, 0, 0]))
        return jnp.sum(result[:, :, 0, 0])

    # per-element ('none' / fall-through, like the PyTorch module)
    kernel = functools.partial(
        _focal_none_kernel, alpha=float(alpha), gamma=gamma,
        ignore_lb=int(ignore_lb))
    idx = lambda n, t: (n, 0, t)
    out = pl.pallas_call(
        kernel,
        out_shape=jax.ShapeDtypeStruct((N, C, HW), logits.dtype),
        grid_spec=pltpu.PrefetchScalarGridSpec(
            num_scalar_prefetch=0,
            grid=(N, num_hw_blocks),
            in_specs=[
                pl.BlockSpec((1, C, tile_hw), idx),
                pl.BlockSpec((1, 1, tile_hw), idx),
            ],
            out_specs=pl.BlockSpec((1, C, tile_hw), idx),
        ),
        compiler_params=pltpu.CompilerParams(
            dimension_semantics=("parallel", "parallel"),
            vmem_limit_bytes=vmem_budget,
        ),
    )(x, lb)
    return out.reshape(N, C, H, W)


# ---------------------------------------------------------------------------
# plain-JAX reference mirroring the PyTorch forward (for sanity check)
# ---------------------------------------------------------------------------
def _reference_focal_loss(logits, label, *, alpha=1.0, gamma=2,
                          reduction="sum", ignore_lb=255):
    N, C, H, W = logits.shape
    valid = (label != ignore_lb)
    lb0 = jnp.where(valid, label, 0)
    onehot = jax.nn.one_hot(lb0, C, axis=1, dtype=jnp.float32)   # (N,C,H,W)
    probs = jax.nn.sigmoid(logits.astype(jnp.float32))
    pt = jnp.where(onehot == 1, probs, 1 - probs)
    alpha_arr = alpha * onehot + (1 - alpha) * (1 - onehot)
    loss = -alpha_arr * (1 - pt) ** gamma * jnp.log(pt + 1e-12)
    loss = loss * valid[:, None, :, :].astype(loss.dtype)
    if reduction == "mean":
        return loss.sum() / valid.sum()
    if reduction == "sum":
        return loss.sum()
    return loss


if __name__ == "__main__":
    key = jax.random.PRNGKey(0)
    k1, k2, k3 = jax.random.split(key, 3)

    RTOL, ATOL = 1e-3, 1e-3

    def check(name, got, want):
        got = jax.block_until_ready(got)
        assert bool(jnp.allclose(got, want, rtol=RTOL, atol=ATOL)), (name, got, want)

    # N=2, C=4, 16x16, int32 labels with ~10% ignore pixels
    N, C, H, W = 2, 4, 16, 16
    logits = jax.random.normal(k1, (N, C, H, W), dtype=jnp.float32)
    label = jax.random.randint(k2, (N, H, W), 0, C, dtype=jnp.int32)
    label = jnp.where(jax.random.uniform(k3, (N, H, W)) < 0.1, 255, label)

    check("sum/alpha1", focal_loss(logits, label, reduction="sum"),
          _reference_focal_loss(logits, label, reduction="sum"))
    check("mean/alpha1", focal_loss(logits, label, reduction="mean"),
          _reference_focal_loss(logits, label, reduction="mean"))
    out_none = focal_loss(logits, label, reduction="none")
    assert out_none.shape == (N, C, H, W)
    check("none/alpha1", out_none,
          _reference_focal_loss(logits, label, reduction="none"))

    # general-alpha (slow) path, non-default gamma
    check("mean/alpha.25",
          focal_loss(logits, label, alpha=0.25, gamma=3, reduction="mean"),
          _reference_focal_loss(logits, label, alpha=0.25, gamma=3,
                                reduction="mean"))
    check("none/alpha.25",
          focal_loss(logits, label, alpha=0.25, gamma=3, reduction="none"),
          _reference_focal_loss(logits, label, alpha=0.25, gamma=3,
                                reduction="none"))

    # spatial size not a multiple of 128 (no host-side padding anywhere)
    H2, W2 = 15, 9
    logits2 = jax.random.normal(k1, (N, C, H2, W2), dtype=jnp.float32)
    label2 = jax.random.randint(k2, (N, H2, W2), 0, C, dtype=jnp.int32)
    check("mean/odd-HW", focal_loss(logits2, label2, reduction="mean"),
          _reference_focal_loss(logits2, label2, reduction="mean"))
    check("none/odd-HW", focal_loss(logits2, label2, reduction="none"),
          _reference_focal_loss(logits2, label2, reduction="none"))

    # N == 1 with several HW tiles: exercises the grouped (dual-TC) reduction
    # including a partial tail tile and a fully out-of-range group block.
    H3, W3 = 36, 32                                  # HW = 1152 -> 5 tiles of 256
    logits3 = jax.random.normal(k1, (1, C, H3, W3), dtype=jnp.float32)
    label3 = jax.random.randint(k2, (1, H3, W3), 0, C, dtype=jnp.int32)
    label3 = jnp.where(jax.random.uniform(k3, (1, H3, W3)) < 0.1, 255, label3)
    check("sum/grouped",
          focal_loss(logits3, label3, reduction="sum", tile_hw=256, num_groups=2),
          _reference_focal_loss(logits3, label3, reduction="sum"))
    check("mean/grouped",
          focal_loss(logits3, label3, reduction="mean", tile_hw=256, num_groups=2),
          _reference_focal_loss(logits3, label3, reduction="mean"))

    # bf16 logits pass through unchanged (cast to f32 in-kernel)
    logits_bf16 = logits.astype(jnp.bfloat16)
    check("sum/bf16",
          focal_loss(logits_bf16, label, reduction="sum"),
          _reference_focal_loss(logits_bf16.astype(jnp.float32), label,
                                reduction="sum"))

    print("KERNEL_OK")
</pallas_src>

<mosaic_0001>
module attributes {stable_mosaic.version = 11 : i64} {
  func.func @_focal_reduce_kernel(%arg0: i32, %arg1: i32, %arg2: i32, %arg3: memref<1x4x256xf32, #tpu.memory_space<vmem>>, %arg4: memref<1x1x256xi32, #tpu.memory_space<vmem>>, %arg5: memref<1x1x8x128xf32, #tpu.memory_space<vmem>>, %arg6: memref<1x256xf32, #tpu.memory_space<vmem>>) attributes {dimension_semantics = [#tpu.dimension_semantics<parallel>, #tpu.dimension_semantics<parallel>, #tpu.dimension_semantics<arbitrary>], iteration_bounds = array<i64: 2, 1, 1>, scalar_prefetch = 0 : i64, scratch_operands = 1 : i64, tpu.core_type = #tpu.core_type<tc>, window_params = [{transform_indices = @transform_0, window_bounds = array<i64: 1, 4, 256>}, {transform_indices = @transform_1, window_bounds = array<i64: 1, 1, 256>}, {transform_indices = @transform_2, window_bounds = array<i64: 1, 1, 8, 128>}]} {
    %c0_i32 = arith.constant 0 : i32
    %0 = arith.cmpi eq, %arg2, %c0_i32 : i32
    %1 = arith.extui %0 : i1 to i32
    %c0_i32_0 = arith.constant 0 : i32
    %2 = arith.cmpi ne, %1, %c0_i32_0 : i32
    scf.if %2 {
      %cst_22 = arith.constant 0.000000e+00 : f32
      %56 = vector.broadcast %cst_22 : f32 to vector<1x256xf32>
      %c0_23 = arith.constant 0 : index
      %c0_24 = arith.constant 0 : index
      %57 = vector.load %arg6[%c0_23, %c0_24] : memref<1x256xf32, #tpu.memory_space<vmem>>, vector<1x256xf32>
      tpu.vector_store %arg6[%c0_23, %c0_24], %56 {strides = array<i32>} : memref<1x256xf32, #tpu.memory_space<vmem>>, vector<1x256xf32>,
    } else {
    }
    %c1_i32 = arith.constant 1 : i32
    %3 = arith.muli %arg1, %c1_i32 : i32
    %4 = arith.addi %3, %arg2 : i32
    %c256_i32 = arith.constant 256 : i32
    %5 = arith.muli %4, %c256_i32 : i32
    %6 = tpu.iota {dimensions = array<i32: 1>} : vector<1x256xi32>
    %7 = vector.broadcast %5 : i32 to vector<1x256xi32>
    %8 = arith.addi %7, %6 : vector<1x256xi32>
    %c256_i32_1 = arith.constant 256 : i32
    %9 = vector.broadcast %c256_i32_1 : i32 to vector<1x256xi32>
    %10 = arith.cmpi slt, %8, %9 : vector<1x256xi32>
    %c0 = arith.constant 0 : index
    %c0_2 = arith.constant 0 : index
    %c0_3 = arith.constant 0 : index
    %11 = vector.load %arg3[%c0, %c0_2, %c0_3] : memref<1x4x256xf32, #tpu.memory_space<vmem>>, vector<1x4x256xf32>
    %12 = vector.shape_cast %11 : vector<1x4x256xf32> to vector<4x256xf32>
    %c0_4 = arith.constant 0 : index
    %c0_5 = arith.constant 0 : index
    %c0_6 = arith.constant 0 : index
    %13 = vector.load %arg4[%c0_4, %c0_5, %c0_6] : memref<1x1x256xi32, #tpu.memory_space<vmem>>, vector<1x1x256xi32>
    %14 = vector.shape_cast %13 : vector<1x1x256xi32> to vector<1x256xi32>
    %c255_i32 = arith.constant 255 : i32
    %15 = vector.broadcast %c255_i32 : i32 to vector<1x256xi32>
    %16 = arith.cmpi ne, %14, %15 : vector<1x256xi32>
    %17 = arith.andi %16, %10 : vector<1x256xi1>
    %18 = tpu.iota {dimensions = array<i32: 0>} : vector<4x1xi32>
    %19 = vector.broadcast %18 : vector<4x1xi32> to vector<4x256xi32>
    %20 = vector.broadcast %14 : vector<1x256xi32> to vector<4x256xi32>
    %21 = arith.cmpi eq, %19, %20 : vector<4x256xi32>
    %cst = arith.constant 0.000000e+00 : f32
    %22 = vector.broadcast %cst : f32 to vector<4x256xf32>
    %23 = arith.select %21, %12, %22 : vector<4x256xi1>, vector<4x256xf32>
    %cst_7 = arith.constant dense<0.000000e+00> : vector<256xf32>
    %24 = vector.multi_reduction <add>, %23, %cst_7 [0] : vector<4x256xf32> to vector<256xf32>
    %25 = vector.shape_cast %24 : vector<256xf32> to vector<1x256xf32>
    %26 = math.absf %25 : vector<1x256xf32>
    %cst_8 = arith.constant 0.000000e+00 : f32
    %27 = vector.broadcast %cst_8 : f32 to vector<1x256xf32>
    %28 = arith.subf %27, %26 : vector<1x256xf32>
    %29 = math.exp %28 : vector<1x256xf32>
    %cst_9 = arith.constant 1.000000e+00 : f32
    %30 = vector.broadcast %cst_9 : f32 to vector<1x256xf32>
    %31 = arith.addf %30, %29 : vector<1x256xf32>
    %cst_10 = arith.constant 1.000000e+00 : f32
    %32 = vector.broadcast %cst_10 : f32 to vector<1x256xf32>
    %33 = arith.divf %32, %31 : vector<1x256xf32>
    %cst_11 = arith.constant 0.000000e+00 : f32
    %34 = vector.broadcast %cst_11 : f32 to vector<1x256xf32>
    %35 = arith.cmpf oge, %25, %34 : vector<1x256xf32>
    %36 = arith.mulf %29, %33 : vector<1x256xf32>
    %37 = arith.select %35, %36, %33 : vector<1x256xi1>, vector<1x256xf32>
    %cst_12 = arith.constant 0.000000e+00 : f32
    %38 = vector.broadcast %cst_12 : f32 to vector<1x256xf32>
    %39 = arith.subf %38, %25 : vector<1x256xf32>
    %cst_13 = arith.constant 0.000000e+00 : f32
    %40 = vector.broadcast %cst_13 : f32 to vector<1x256xf32>
    %41 = arith.maximumf %39, %40 : vector<1x256xf32>
    %cst_14 = arith.constant 1.000000e+00 : f32
    %42 = vector.broadcast %cst_14 : f32 to vector<1x256xf32>
    %43 = arith.addf %42, %29 : vector<1x256xf32>
    %44 = math.log %43 : vector<1x256xf32>
    %45 = arith.addf %41, %44 : vector<1x256xf32>
    %46 = arith.mulf %37, %37 : vector<1x256xf32>
    %47 = arith.mulf %46, %45 : vector<1x256xf32>
    %cst_15 = arith.constant 0.000000e+00 : f32
    %48 = vector.broadcast %cst_15 : f32 to vector<1x256xf32>
    %49 = arith.select %17, %47, %48 : vector<1x256xi1>, vector<1x256xf32>
    %c0_16 = arith.constant 0 : index
    %c0_17 = arith.constant 0 : index
    %50 = vector.load %arg6[%c0_16, %c0_17] : memref<1x256xf32, #tpu.memory_space<vmem>>, vector<1x256xf32>
    %51 = arith.addf %50, %49 : vector<1x256xf32>
    %c0_18 = arith.constant 0 : index
    %c0_19 = arith.constant 0 : index
    %52 = vector.load %arg6[%c0_18, %c0_19] : memref<1x256xf32, #tpu.memory_space<vmem>>, vector<1x256xf32>
    tpu.vector_store %arg6[%c0_18, %c0_19], %51 {strides = array<i32>} : memref<1x256xf32, #tpu.memory_space<vmem>>, vector<1x256xf32>,
    %c0_i32_20 = arith.constant 0 : i32
    %53 = arith.cmpi eq, %arg2, %c0_i32_20 : i32
    %54 = arith.extui %53 : i1 to i32
    %c0_i32_21 = arith.constant 0 : i32
    %55 = arith.cmpi ne, %54, %c0_i32_21 : i32
    scf.if %55 {
      %cst_22 = arith.constant 0.000000e+00 : f32
      %56 = vector.broadcast %cst_22 : f32 to vector<8x128xf32>
      %c0_23 = arith.constant 0 : index
      %c0_24 = arith.constant 0 : index
      %57 = vector.load %arg6[%c0_23, %c0_24] : memref<1x256xf32, #tpu.memory_space<vmem>>, vector<1x256xf32>
      %58 = vector.shape_cast %57 : vector<1x256xf32> to vector<1x1x256xf32>
      %cst_25 = arith.constant dense<0.000000e+00> : vector<1xf32>
      %59 = vector.multi_reduction <add>, %58, %cst_25 [1, 2] : vector<1x1x256xf32> to vector<1xf32>
      %60 = vector.shape_cast %59 : vector<1xf32> to vector<1x1x1xf32>
      %61 = vector.extract %60[0, 0, 0] : f32 from vector<1x1x1xf32>
      %62 = vector.broadcast %61 : f32 to vector<8x128xf32>
      %63 = arith.addf %56, %62 : vector<8x128xf32>
      %c0_26 = arith.constant 0 : index
      %c0_27 = arith.constant 0 : index
      %c0_28 = arith.constant 0 : index
      %c0_29 = arith.constant 0 : index
      %64 = vector.load %arg5[%c0_26, %c0_27, %c0_28, %c0_29] : memref<1x1x8x128xf32, #tpu.memory_space<vmem>>, vector<1x1x8x128xf32>
      %65 = vector.shape_cast %64 : vector<1x1x8x128xf32> to vector<8x128xf32>
      %66 = vector.shape_cast %63 : vector<8x128xf32> to vector<1x1x8x128xf32>
      tpu.vector_store %arg5[%c0_26, %c0_27, %c0_28, %c0_29], %66 {strides = array<i32>} : memref<1x1x8x128xf32, #tpu.memory_space<vmem>>, vector<1x1x8x128xf32>,
    } else {
    }
    return
  }
  func.func @transform_0(%arg0: i32, %arg1: i32, %arg2: i32) -> (i32, i32, i32) {
    %c1_i32 = arith.constant 1 : i32
    %0 = arith.muli %arg1, %c1_i32 : i32
    %1 = arith.addi %0, %arg2 : i32
    %c0_i32 = arith.constant 0 : i32
    %2 = arith.minsi %1, %c0_i32 : i32
    %c0_i32_0 = arith.constant 0 : i32
    %c0_i32_1 = arith.constant 0 : i32
    return %arg0, %c0_i32_0, %2 : i32, i32, i32
  }
  func.func @transform_1(%arg0: i32, %arg1: i32, %arg2: i32) -> (i32, i32, i32) {
    %c1_i32 = arith.constant 1 : i32
    %0 = arith.muli %arg1, %c1_i32 : i32
    %1 = arith.addi %0, %arg2 : i32
    %c0_i32 = arith.constant 0 : i32
    %2 = arith.minsi %1, %c0_i32 : i32
    %c0_i32_0 = arith.constant 0 : i32
    %c0_i32_1 = arith.constant 0 : i32
    return %arg0, %c0_i32_0, %2 : i32, i32, i32
  }
  func.func @transform_2(%arg0: i32, %arg1: i32, %arg2: i32) -> (i32, i32, i32, i32) {
    %c0_i32 = arith.constant 0 : i32
    %c0_i32_0 = arith.constant 0 : i32
    %c0_i32_1 = arith.constant 0 : i32
    return %arg0, %arg1, %c0_i32, %c0_i32_0 : i32, i32, i32, i32
  }
}

</mosaic_0001>

<llo_original>
// kernel: tpu_custom_call.1
$region0: #{tpu_custom_call.1}
  #allocation0 [shape = 'u32[]', space=smem, size = 0x4, offset = 0x4, fixed_abs, tag = 'smem constant byte address 0x4 - core index']
  #allocation1 [shape = 'u32[144,128]{1,0:T(1,128)}', space=vmem, size = 0x12000, scoped, tag = 'internal scratch']
  #allocation2 [shape = 'f32[1,256]{1,0:T(1,128)}', space=vmem, size = 0x400, scoped, tag = 'scratch operand']
  %s0 = inlined_call_operand.hbm [shape: f32[2,4,256], index: 0, kind: input, shape index: {}]
  %s1 = inlined_call_operand.hbm [shape: s32[2,1,256], index: 1, kind: input, shape index: {}]
  %s2 = inlined_call_operand.hbm [shape: f32[2,1,8,128], index: 2, kind: output, shape index: {}]
  %s3 = sld [smem:[#allocation0]]
  $region57: #{tpu_custom_call.1} parent=0
    _
  %s5 = ssub.s32 1, %s3
  %s6 = scalar_select 0, %s5, %s3
  $region1: #{tpu_custom_call.1} parent=0
    #allocation3 [shape = 'u8[8192]{0}', space=vmem, size = 0x2000, scoped, tag = 'input window, operand 0']
    #allocation4 [shape = 's32[2]{0}', space=sflag, size = 0x8, scoped, tag = 'scoped memory for tpu_custom_call.1']
    #allocation5 [shape = 's32[2]{0}', space=sflag, size = 0x8, scoped, tag = 'scoped memory for tpu_custom_call.1']
    #allocation6 [shape = 'u8[2048]{0}', space=vmem, size = 0x800, scoped, tag = 'input window, operand 1']
    #allocation7 [shape = 's32[2]{0}', space=sflag, size = 0x8, scoped, tag = 'scoped memory for tpu_custom_call.1']
    #allocation8 [shape = 'u8[8192]{0}', space=vmem, size = 0x2000, scoped, tag = 'output window, operand 0']
    %7 = vsyncpa [#allocation4], 0
    %s8 = scalar_lea.sflag [#allocation4], 1
    %9 = vsyncpa %s8, 0
    %10 = vsyncpa [#allocation7], 0
    %s11 = scalar_lea.sflag [#allocation7], 1
    %12 = vsyncpa %s11, 0
    %13 = vsyncpa [#allocation5], 0
    %s14 = scalar_lea.sflag [#allocation5], 1
    %15 = vsyncpa %s14, 0
    loop: start=0, step=1, limit=4
    $region2: #{tpu_custom_call.1} parent=1 // loop_pre_header
      _
    $region3: #{tpu_custom_call.1} parent=1 // loop_header
      %s17 = sphi 0, %s21
      %p18 = scmp.ge.s32.totalorder %s17, 4
      %s24 = sphi 0, %s43
      %s25 = sphi 0, %s39
      %s26 = sphi 0, %s35
      %s27 = sphi 0, %s24
      %s28 = sphi 0, %s25
      %s29 = sphi 0, %s26
      %s30 = sphi 0, %s27
      %s31 = sphi 0, %s28
      %s32 = sphi 0, %s29
      %s54 = sphi 0, %s56
      %s57 = sphi 0, %s54
      %s58 = sphi 0, %s57
      %s74 = sphi 0, %s58
      %s88 = sphi 0, %s90
      %s91 = sphi 0, %s88
      %s92 = sphi 0, %s91
      %s108 = sphi 0, %s92
      %s116 = sphi 0, %s118
      %s119 = sphi 0, %s116
      %s120 = sphi 0, %s119
      %s136 = sphi 0, %s120
    $region4: #{tpu_custom_call.1} parent=1 // loop_header_branch
      %20 = sbr.rel (%p18) target = $region8
    $region5: #{tpu_custom_call.1} parent=1 // loop_body
      %s22 = ssub.s32 %s17, 1
      %s23 = ssub.s32 %s17, 2
      %s33 = sadd.s32 1, %s26
      %p34 = scmp.ge.s32.totalorder %s33, 1
      %s35 = scalar_select %p34, 0, %s33
      %s36 = sadd.s32 1, %s25
      %s37 = scalar_select %p34, %s36, %s25
      %p38 = scmp.ge.s32.totalorder %s37, 1
      %s39 = scalar_select %p38, 0, %s37
      %s40 = sadd.s32 1, %s24
      %s41 = scalar_select %p38, %s40, %s24
      %p42 = scmp.ge.s32.totalorder %s41, 2
      %s43 = scalar_select %p42, 0, %s41
      %s44 = sadd.s32 %s25, %s26
      %p45 = scmp.lt.s32.totalorder %s44, 0
      %s46 = scalar_select %p45, %s44, 0
      %s47 = sadd.s32 %s39, %s35
      %p48 = scmp.lt.s32.totalorder %s47, 0
      %s49 = scalar_select %p48, %s47, 0
      %s50 = ssub.s32 %s24, %s43
      %s51 = ssub.s32 %s46, %s49
      %s52 = sor.u32 %s50, %s51
      %p53 = scmp.eq.s32.totalorder %s52, 0
      %s55 = sadd.s32 %s54, 1
      %s56 = scalar_select %p53, %s54, %s55
      %p59 = pneg %p53
      %p60 = scmp.eq.s32.totalorder %s17, 1
      %p61 = por %p59, %p60
      %p62 = scmp.ne.s32.totalorder %s54, %s57
      %p63 = scmp.eq.s32.totalorder %s17, 0
      %p64 = por %p62, %p63
      %p65 = scmp.ne.s32.totalorder %s54, %s57
      %p66 = scmp.eq.s32.totalorder %s22, 1
      %p67 = por %p65, %p66
      %p68 = scmp.ne.s32.totalorder %s57, %s58
      %p69 = scmp.eq.s32.totalorder %s22, 0
      %p70 = por %p68, %p69
      %p71 = scmp.ne.s32.totalorder %s57, %s58
      %p72 = scmp.eq.s32.totalorder %s23, 1
      %p73 = por %p71, %p72
      %p75 = scmp.ne.s32.totalorder %s58, %s74
      %p76 = scmp.eq.s32.totalorder %s23, 0
      %p77 = por %p75, %p76
      %s78 = sadd.s32 %s25, %s26
      %p79 = scmp.lt.s32.totalorder %s78, 0
      %s80 = scalar_select %p79, %s78, 0
      %s81 = sadd.s32 %s39, %s35
      %p82 = scmp.lt.s32.totalorder %s81, 0
      %s83 = scalar_select %p82, %s81, 0
      %s84 = ssub.s32 %s24, %s43
      %s85 = ssub.s32 %s80, %s83
      %s86 = sor.u32 %s84, %s85
      %p87 = scmp.eq.s32.totalorder %s86, 0
      %s89 = sadd.s32 %s88, 1
      %s90 = scalar_select %p87, %s88, %s89
      %p93 = pneg %p87
      %p94 = scmp.eq.s32.totalorder %s17, 1
      %p95 = por %p93, %p94
      %p96 = scmp.ne.s32.totalorder %s88, %s91
      %p97 = scmp.eq.s32.totalorder %s17, 0
      %p98 = por %p96, %p97
      %p99 = scmp.ne.s32.totalorder %s88, %s91
      %p100 = scmp.eq.s32.totalorder %s22, 1
      %p101 = por %p99, %p100
      %p102 = scmp.ne.s32.totalorder %s91, %s92
      %p103 = scmp.eq.s32.totalorder %s22, 0
      %p104 = por %p102, %p103
      %p105 = scmp.ne.s32.totalorder %s91, %s92
      %p106 = scmp.eq.s32.totalorder %s23, 1
      %p107 = por %p105, %p106
      %p109 = scmp.ne.s32.totalorder %s92, %s108
      %p110 = scmp.eq.s32.totalorder %s23, 0
      %p111 = por %p109, %p110
      %s112 = ssub.s32 %s24, %s43
      %s113 = ssub.s32 %s25, %s39
      %s114 = sor.u32 %s112, %s113
      %p115 = scmp.eq.s32.totalorder %s114, 0
      %s117 = sadd.s32 %s116, 1
      %s118 = scalar_select %p115, %s116, %s117
      %p121 = pneg %p115
      %p122 = scmp.eq.s32.totalorder %s17, 1
      %p123 = por %p121, %p122
      %p124 = scmp.ne.s32.totalorder %s116, %s119
      %p125 = scmp.eq.s32.totalorder %s17, 0
      %p126 = por %p124, %p125
      %p127 = scmp.ne.s32.totalorder %s116, %s119
      %p128 = scmp.eq.s32.totalorder %s22, 1
      %p129 = por %p127, %p128
      %p130 = scmp.ne.s32.totalorder %s119, %s120
      %p131 = scmp.eq.s32.totalorder %s22, 0
      %p132 = por %p130, %p131
      %p133 = scmp.ne.s32.totalorder %s119, %s120
      %p134 = scmp.eq.s32.totalorder %s23, 1
      %p135 = por %p133, %p134
      %p137 = scmp.ne.s32.totalorder %s120, %s136
      %p138 = scmp.eq.s32.totalorder %s23, 0
      %p139 = por %p137, %p138
      %p140 = scmp.le.s32.totalorder 1, %s17
      %p141 = scmp.lt.s32.totalorder %s17, 3
      %p142 = pnand %p140, %p141
      %p143 = pneg %p142
      // Predicated region
      $region9: #{tpu_custom_call.1} parent=5 // pred_check
        _
      $region10: #{tpu_custom_call.1} parent=5 // pred_check_branch
        %145 = sbr.rel (%p142) target = $region12
      $region11: #{tpu_custom_call.1} parent=5 // pred_region
        %s146 = ssub.s32 %s17, 1
      $region12: #{tpu_custom_call.1} parent=5 // pred_fallthru
        _
      %p147 = scmp.lt.s32.totalorder %s17, 2
      // Predicated region
      $region13: #{tpu_custom_call.1} parent=5 // pred_check
        %p148 = pneg %p147
      $region14: #{tpu_custom_call.1} parent=5 // pred_check_branch
        %150 = sbr.rel (%p148) target = $region16
      $region15: #{tpu_custom_call.1} parent=5 // pred_region
        // Predicated region
        $region17: #{tpu_custom_call.1} parent=15 // pred_check
          %p151 = pneg %p64
        $region18: #{tpu_custom_call.1} parent=15 // pred_check_branch
          %153 = sbr.rel (%p151) target = $region20
        $region19: #{tpu_custom_call.1} parent=15 // pred_region
          %s154 = sand.u32 %s54, 1
          %s155 = scalar_lea.sflag [#allocation4], %s154
          %s156 = sand.u32 %s54, 1
          %s157 = smul.addr %s156, 8
          %s158 = scalar_lea.vmem [#allocation3], %s157
          %s159 = sadd.s32 %s25, %s26
          %p160 = scmp.lt.s32.totalorder %s159, 0
          %s161 = scalar_select %p160, %s159, 0
          %s162 = smul.u32 2, %s161
          %s164 = ssub.s32 128, 128
          %165 = vsyncadd %s155, %s164
          %s166 = smul.addr %s24, 2
          %s167 = sadd.s32 %s162, %s166
          %s168 = smul.addr %s167, 64
          %s169 = scalar_lea.hbm %s0, %s168
          %s171 = sshll.u32 %s158, 4
          %s172 = int_to_ptr.vmem [resolvable:$true] %s171
          %174 = dma.hbm_to_vmem [thread:$0]  %s169, 128, %s172, %s155
        $region20: #{tpu_custom_call.1} parent=15 // pred_fallthru
          _
        // Predicated region
        $region21: #{tpu_custom_call.1} parent=15 // pred_check
          %p175 = pneg %p98
        $region22: #{tpu_custom_call.1} parent=15 // pred_check_branch
          %177 = sbr.rel (%p175) target = $region24
        $region23: #{tpu_custom_call.1} parent=15 // pred_region
          %s178 = sand.u32 %s88, 1
          %s179 = scalar_lea.sflag [#allocation7], %s178
          %s180 = sand.u32 %s88, 1
          %s181 = smul.addr %s180, 2
          %s182 = scalar_lea.vmem [#allocation6], %s181
          %s183 = sadd.s32 %s25, %s26
          %p184 = scmp.lt.s32.totalorder %s183, 0
          %s185 = scalar_select %p184, %s183, 0
          %s186 = smul.u32 2, %s185
          %s188 = ssub.s32 32, 32
          %189 = vsyncadd %s179, %s188
          %s190 = smul.addr %s24, 2
          %s191 = sadd.s32 %s186, %s190
          %s192 = smul.addr %s191, 16
          %s193 = scalar_lea.hbm %s1, %s192
          %s195 = sshll.u32 %s182, 4
          %s196 = int_to_ptr.vmem [resolvable:$true] %s195
          %198 = dma.hbm_to_vmem [thread:$0]  %s193, 32, %s196, %s179
        $region24: #{tpu_custom_call.1} parent=15 // pred_fallthru
          _
      $region16: #{tpu_custom_call.1} parent=5 // pred_fallthru
        _
      %p199 = scmp.le.s32.totalorder 1, %s17
      %p200 = scmp.lt.s32.totalorder %s17, 3
      %p201 = pnand %p199, %p200
      %p202 = pneg %p201
      // Predicated region
      $region25: #{tpu_custom_call.1} parent=5 // pred_check
        _
      $region26: #{tpu_custom_call.1} parent=5 // pred_check_branch
        %204 = sbr.rel (%p201) target = $region28
      $region27: #{tpu_custom_call.1} parent=5 // pred_region
        %s205 = ssub.s32 %s17, 1
        %s206 = sand.u32 %s57, 1
        %s207 = scalar_lea.sflag [#allocation4], %s206
        %s208 = sand.u32 %s57, 1
        %s209 = smul.addr %s208, 8
        %s210 = scalar_lea.vmem [#allocation3], %s209
        // Predicated region
        $region29: #{tpu_custom_call.1} parent=27 // pred_check
          %p211 = pneg %p70
        $region30: #{tpu_custom_call.1} parent=27 // pred_check_branch
          %213 = sbr.rel (%p211) target = $region32
        $region31: #{tpu_custom_call.1} parent=27 // pred_region
          %214 = dma.done %s207, 128
        $region32: #{tpu_custom_call.1} parent=27 // pred_fallthru
          _
        %s215 = sand.u32 %s91, 1
        %s216 = scalar_lea.sflag [#allocation7], %s215
        %s217 = sand.u32 %s91, 1
        %s218 = smul.addr %s217, 2
        %s219 = scalar_lea.vmem [#allocation6], %s218
        // Predicated region
        $region33: #{tpu_custom_call.1} parent=27 // pred_check
          %p220 = pneg %p104
        $region34: #{tpu_custom_call.1} parent=27 // pred_check_branch
          %222 = sbr.rel (%p220) target = $region36
        $region35: #{tpu_custom_call.1} parent=27 // pred_region
          %223 = dma.done %s216, 32
        $region36: #{tpu_custom_call.1} parent=27 // pred_fallthru
          _
        %s224 = sand.u32 %s57, 1
        %s225 = scalar_lea.sflag [#allocation4], %s224
        %s226 = sand.u32 %s57, 1
        %s227 = smul.addr %s226, 8
        %s228 = scalar_lea.vmem [#allocation3], %s227
        %p229 = pneg %p70
        %p230 = pneg %p67
        %s231 = sand.u32 %s91, 1
        %s232 = scalar_lea.sflag [#allocation7], %s231
        %s233 = sand.u32 %s91, 1
        %s234 = smul.addr %s233, 2
        %s235 = scalar_lea.vmem [#allocation6], %s234
        %p236 = pneg %p104
        %p237 = pneg %p101
        %p238 = pneg %p132
        %p239 = pneg %p129
        %s240 = sand.u32 %s119, 1
        %s241 = scalar_lea.sflag [#allocation5], %s240
        %s242 = sand.u32 %s119, 1
        %s243 = smul.addr %s242, 8
        %s244 = scalar_lea.vmem [#allocation8], %s243
        %s245 = sadd.s32 %s28, %s29
        %p246 = scmp.lt.s32.totalorder %s245, 0
        %s247 = scalar_select %p246, %s245, 0
        %s248 = smul.u32 2, %s247
        %s249 = sadd.s32 %s28, %s29
        %p250 = scmp.lt.s32.totalorder %s249, 0
        %s251 = scalar_select %p250, %s249, 0
        %s252 = smul.u32 2, %s251
        %p253 = scmp.eq.s32.totalorder %s29, 0
        // Predicated region
        $region37: #{tpu_custom_call.1} parent=27 // pred_check
          %p254 = pneg %p253
        $region38: #{tpu_custom_call.1} parent=27 // pred_check_branch
          %256 = sbr.rel (%p254) target = $region40
        $region39: #{tpu_custom_call.1} parent=27 // pred_region
          %v257 = vlaneseq
          %vm258 = vcmp.ge.s32.totalorder %v257, 0
          %vm259 = vcmp.lt.s32.totalorder %v257, 256
          %vm260 = vmand %vm258, %vm259
          %261 = vst.msk [vmem:[#allocation2] sm:$0x3] %vm260, 0.0
        $region40: #{tpu_custom_call.1} parent=27 // pred_fallthru
          _
        %s262 = sadd.s32 %s28, %s29
        %s263 = smul.u32 %s262, 256
        %v264 = vlaneseq
        %v265 = vand.u32 %v264, 127
        %v266 = vadd.s32 %v265, 128
        %v267 = vstv %s263
        %v268 = vadd.s32 %v267, %v265
        %v269 = vadd.s32 %v267, %v266
        %vm270 = vcmp.lt.s32.totalorder %v268, 256
        %vm271 = vcmp.lt.s32.totalorder %v269, 256
        %v272 = vld [vmem:[%s210] sm:$0xff]
        %v273 = vld [vmem:[%s219] sm:$0x3]
        %vm274 = vcmp.ne.s32.totalorder %v273, 255
        %v275 = vsel %vm270, 1, 0
        %v276 = vsel %vm271, 1, 0
        %v277 = vcombine.low %v275, %v276
        %v279 = vunpack.c.l.s4 1966171168
        %v280 = vunpack.c.0.s8 %v279
        %v281 = vlaneseq
        %v282 = vshrl.u32 %v281, 7
        %v283 = vsub.s32 %v280, %v282
        %v284 = vrot.slane %v277, %v283
        %v286 = vunpack.c.l.s4 1966171168
        %v287 = vunpack.c.0.s8 %v286
        %v288 = vlaneseq
        %v289 = vshrl.u32 %v288, 7
        %v290 = vsub.s32 %v287, %v289
        %v291 = vrot.slane %v284, %v290
        %vm292 = vcmp.ne.s32.totalorder %v291, 0
        %vm293 = vmand %vm274, %vm292
        %v294 = vlaneseq
        %v295 = vshrl.u32 %v294, 7
        %v296 = vlaneseq
        %v297 = vshrl.u32 %v296, 7
        %v298 = vsub.s32 0, %v297
        %v299 = vrot.slane %v273, %v298
        %v300 = vlaneseq
        %v301 = vshrl.u32 %v300, 7
        %v302 = vsub.s32 1, %v301
        %v303 = vrot.slane %v273, %v302
        %vm304 = vcmp.eq.s32.totalorder %v295, %v299
        %vm305 = vcmp.eq.s32.totalorder %v295, %v303
        %v307 = vcombine.high %v272, %v272
        %v309 = vsel %vm304, %v272, 0.0
        %v310 = vsel %vm305, %v307, 0.0
        %vm311 = vcmask 1043456
        %v312 = vsel %vm311, %v309, 0.0
        %v313 = vrot.slane %v312, 4
        %v314 = vadd.f32 %v312, %v313
        %v315 = vrot.slane %v314, 2
        %v316 = vadd.f32 %v314, %v315
        %v317 = vrot.slane %v316, 1
        %v318 = vadd.f32 %v316, %v317
        %v319 = vsel %vm311, %v310, 0.0
        %v320 = vrot.slane %v319, 4
        %v321 = vadd.f32 %v319, %v320
        %v322 = vrot.slane %v321, 2
        %v323 = vadd.f32 %v321, %v322
        %v324 = vrot.slane %v323, 1
        %v325 = vadd.f32 %v323, %v324
        %v326 = vand.u32 2147483647, %v318
        %v327 = vand.u32 2147483647, %v325
        %v328 = vsub.f32 0.0, %v326
        %v329 = vsub.f32 0.0, %v327
        %v330 = vmul.f32 %v328, 1.442695
        %v331 = vpow.pop %v330
        %v332 = vmul.f32 %v329, 1.442695
        %v333 = vpow.pop %v332
        %v334 = vadd.f32 %v331, 1.0
        %v335 = vadd.f32 %v333, 1.0
        %v336 = vrcp.pop %v334
        %v337 = vmul.f32 1.0, %v336
        %v338 = vrcp.pop %v335
        %v339 = vmul.f32 1.0, %v338
        %vm340 = vcmp.ge.f32.partialorder %v318, 0.0
        %vm341 = vcmp.ge.f32.partialorder %v325, 0.0
        %v342 = vmul.f32 %v331, %v337
        %v343 = vmul.f32 %v333, %v339
        %v344 = vsel %vm340, %v342, %v337
        %v345 = vsel %vm341, %v343, %v339
        %v346 = vsub.f32 0.0, %v318
        %v347 = vsub.f32 0.0, %v325
        %v348 = vmax.f32 %v346, 0.0
        %v349 = vmax.f32 %v347, 0.0
        %v350 = vlog2.pop %v334
        %v351 = vmul.f32 %v350, 0.6931472
        %v352 = vlog2.pop %v335
        %v353 = vmul.f32 %v352, 0.6931472
        %v354 = vadd.f32 %v348, %v351
        %v355 = vadd.f32 %v349, %v353
        %v356 = vmul.f32 %v344, %v344
        %v357 = vmul.f32 %v345, %v345
        %v358 = vmul.f32 %v356, %v354
        %v359 = vmul.f32 %v357, %v355
        %v362 = vcombine.low %v358, %v359
        %v364 = vunpack.c.l.s4 1966171168
        %v365 = vunpack.c.0.s8 %v364
        %v366 = vlaneseq
        %v367 = vshrl.u32 %v366, 7
        %v368 = vsub.s32 %v365, %v367
        %v369 = vrot.slane %v362, %v368
        %v371 = vunpack.c.l.s4 1966171168
        %v372 = vunpack.c.0.s8 %v371
        %v373 = vlaneseq
        %v374 = vshrl.u32 %v373, 7
        %v375 = vsub.s32 %v372, %v374
        %v376 = vrot.slane %v369, %v375
        %v378 = vsel %vm293, %v376, 0.0
        %v379 = vld [vmem:[#allocation2] sm:$0x3]
        %v380 = vadd.f32 %v379, %v378
        %v381 = vlaneseq
        %vm382 = vcmp.ge.s32.totalorder %v381, 0
        %vm383 = vcmp.lt.s32.totalorder %v381, 256
        %vm384 = vmand %vm382, %vm383
        %385 = vst.msk [vmem:[#allocation2] sm:$0x3] %vm384, %v380
        // Predicated region
        $region41: #{tpu_custom_call.1} parent=27 // pred_check
          %p386 = pneg %p253
        $region42: #{tpu_custom_call.1} parent=27 // pred_check_branch
          %388 = sbr.rel (%p386) target = $region44
        $region43: #{tpu_custom_call.1} parent=27 // pred_region
          %v389 = vld [vmem:[#allocation2] sm:$0x3]
          %v391 = vlaneseq
          %v392 = vshrl.u32 %v391, 7
          %v393 = vsub.s32 0, %v392
          %v394 = vrot.slane %v389, %v393
          %v395 = vlaneseq
          %v396 = vshrl.u32 %v395, 7
          %v397 = vsub.s32 1, %v396
          %v398 = vrot.slane %v389, %v397
          %vm401 = vcmask 1040384
          %v402 = vsel %vm401, %v394, 0.0
          %v403 = vsel %vm401, %v398, 0.0
          %v404 = vadd.f32 %v402, %v403
          %405 = vadd.xlane.f32.xlu0 %v404
          %v406 = vpop.xlane.xlu0 %405
          %v407 = vrot.slane %v406, 4
          %v408 = vadd.f32 %v406, %v407
          %v409 = vrot.slane %v408, 2
          %v410 = vadd.f32 %v408, %v409
          %v411 = vrot.slane %v410, 1
          %v412 = vadd.f32 %v410, %v411
          %s413 = vtos %v412
          %v414 = vstv %s413
          %v415 = vadd.f32 %v414, 0.0
          %416 = vst [vmem:[%s244] sm:$0xff] %v415
        $region44: #{tpu_custom_call.1} parent=27 // pred_fallthru
          _
        %s417 = sand.u32 %s119, 1
        %s418 = scalar_lea.sflag [#allocation5], %s417
        %s419 = sand.u32 %s119, 1
        %s420 = smul.addr %s419, 8
        %s421 = scalar_lea.vmem [#allocation8], %s420
        // Predicated region
        $region45: #{tpu_custom_call.1} parent=27 // pred_check
          %p422 = pneg %p129
        $region46: #{tpu_custom_call.1} parent=27 // pred_check_branch
          %424 = sbr.rel (%p422) target = $region48
        $region47: #{tpu_custom_call.1} parent=27 // pred_region
          %s426 = ssub.s32 128, 128
          %427 = vsyncadd %s418, %s426
          %s428 = sadd.s32 %s28, %s27
          %s429 = smul.addr %s428, 128
          %s430 = scalar_lea.hbm %s2, %s429
          %s432 = sshll.u32 %s421, 4
          %s433 = int_to_ptr.vmem [resolvable:$true] %s432
          %435 = dma.vmem_to_hbm [thread:$0]  %s433, 128, %s430, %s418
        $region48: #{tpu_custom_call.1} parent=27 // pred_fallthru
          _
      $region28: #{tpu_custom_call.1} parent=5 // pred_fallthru
        _
      %p436 = scmp.le.s32.totalorder 2, %s17
      // Predicated region
      $region49: #{tpu_custom_call.1} parent=5 // pred_check
        %p437 = pneg %p436
      $region50: #{tpu_custom_call.1} parent=5 // pred_check_branch
        %439 = sbr.rel (%p437) target = $region52
      $region51: #{tpu_custom_call.1} parent=5 // pred_region
        %s440 = ssub.s32 %s17, 2
        // Predicated region
        $region53: #{tpu_custom_call.1} parent=51 // pred_check
          %p441 = pneg %p135
        $region54: #{tpu_custom_call.1} parent=51 // pred_check_branch
          %443 = sbr.rel (%p441) target = $region56
        $region55: #{tpu_custom_call.1} parent=51 // pred_region
          %s444 = sand.u32 %s120, 1
          %s445 = scalar_lea.sflag [#allocation5], %s444
          %s446 = sand.u32 %s120, 1
          %s447 = smul.addr %s446, 8
          %s448 = scalar_lea.vmem [#allocation8], %s447
          %449 = dma.done %s445, 128
        $region56: #{tpu_custom_call.1} parent=51 // pred_fallthru
          _
      $region52: #{tpu_custom_call.1} parent=5 // pred_fallthru
        _
    $region6: #{tpu_custom_call.1} parent=1 // loop_footer
      %s21 = sadd.s32 1, %s17
    $region7: #{tpu_custom_call.1} parent=1 // loop_footer_branch
      %16 = sbr.rel target = $region3
    $region8: #{tpu_custom_call.1} parent=1 // loop_exit
      _
    %450 = vsyncpa [#allocation4], 1
    %s451 = scalar_lea.sflag [#allocation4], 1
    %452 = vsyncpa %s451, 1
    %453 = vsyncpa [#allocation7], 1
    %s454 = scalar_lea.sflag [#allocation7], 1
    %455 = vsyncpa %s454, 1
    %456 = vsyncpa [#allocation5], 1
    %s457 = scalar_lea.sflag [#allocation5], 1
    %458 = vsyncpa %s457, 1

</llo_original>
